<compile_context>
chip_gen: v6e
topology: v6e:2x2x1
jax: 0.10.0
libtpu: 0.0.40
codegen_flags: <defaults>
</compile_context>

<pallas_src>
import jax
import jax.numpy as jnp
from jax.experimental import pallas as pl
from jax.experimental.pallas import tpu as pltpu


def _choose_batch_tile(batch, bytes_per_batch_elem, target_bytes=8 << 20):
    """Largest divisor of `batch` whose x-block fits `target_bytes`, preferring
    >= 4 grid steps (2 per v7x TensorCore), else >= 2, when the batch allows."""
    divisors = [d for d in range(1, batch + 1) if batch % d == 0]
    fitting = [d for d in divisors if d * bytes_per_batch_elem <= target_bytes] or [1]
    for min_steps in (4, 2):
        candidates = [d for d in fitting if batch // d >= min_steps]
        if candidates:
            return max(candidates)
    return max(fitting)


def _conv_bn_operators(conv_w, bn_scale, H, W):
    """Dense (HW, HW) operators (one per pooled channel) realizing the KxK SAME
    zero-padded conv with the eval-mode BatchNorm scale folded in.

    logits_flat = avg_flat @ mat[0] + max_flat @ mat[1]  reproduces
    Conv2d(2, 1, K, padding=K//2, bias=False) followed by `* bn_scale`.
    """
    _, _, K, _ = conv_w.shape
    P = K // 2
    HW = H * W
    w = conv_w[0].astype(jnp.float32) * bn_scale            # (2, K, K)
    hi = jnp.arange(H)
    wi = jnp.arange(W)
    dh = hi[:, None] - hi[None, :] + P                       # (H_in, H_out): kernel row
    dw = wi[:, None] - wi[None, :] + P                       # (W_in, W_out): kernel col
    vh = (dh >= 0) & (dh < K)
    vw = (dw >= 0) & (dw < K)
    # gathered[c, hi, ho, wi, wo] = w[c, dh, dw] (clipped indices, masked below)
    g = w[:, jnp.clip(dh, 0, K - 1), :][:, :, :, jnp.clip(dw, 0, K - 1)]
    g = jnp.where(vh[None, :, :, None, None] & vw[None, None, None, :, :], g, 0.0)
    mat = g.transpose(0, 1, 3, 2, 4).reshape(2, HW, HW)      # (c, hi*W+wi, ho*W+wo)
    return mat[0], mat[1]


def _spatial_attention_kernel(bn_bias_ref, cm_avg_ref, cm_max_ref, x_ref, o_ref):
    C = x_ref.shape[1]
    x_blk = x_ref[...]                                       # (bt, C, HW), native dtype
    # Channel pooling over the sublane axis; the mean accumulates in f32.
    avg = jnp.sum(x_blk.astype(jnp.float32), axis=1) * (1.0 / C)   # (bt, HW) f32
    mx = jnp.max(x_blk, axis=1).astype(jnp.float32)                # (bt, HW) f32

    # KxK SAME conv (2 -> 1 channels) + folded BN scale: two resident MXU matmuls
    # in the flat lane-dense layout; then the scalar BN bias.
    logits = (jnp.dot(avg, cm_avg_ref[...], preferred_element_type=jnp.float32)
              + jnp.dot(mx, cm_max_ref[...], preferred_element_type=jnp.float32)
              + bn_bias_ref[0])
    scale = 1.0 / (1.0 + jnp.exp(-logits))                   # sigmoid, (bt, HW) f32

    # Re-read x for the lane-dense broadcast multiply; keeps the big block's
    # live range short (no spill across the matmul/sigmoid section) and keeps
    # the heavy stream in the input's native dtype.
    x_blk2 = x_ref[...]
    o_ref[...] = (x_blk2 * scale[:, None, :].astype(x_blk2.dtype)).astype(o_ref.dtype)


def spatial_attention(x, conv_w, bn_gamma, bn_beta, bn_mean, bn_var, eps=1e-5):
    """x: (B, C, H, W); conv_w: (1, 2, K, K); bn_*: (1,) BatchNorm2d(1) params (eval mode)."""
    x = jnp.asarray(x)
    conv_w = jnp.asarray(conv_w)
    B, C, H, W = x.shape
    _, two, K, K2 = conv_w.shape
    assert two == 2 and K == K2, "conv weight must be (1, 2, K, K)"
    HW = H * W
    # TODO(synk): for large H*W the dense (HW, HW) conv operator grows quadratically;
    # switch to a spatial grid axis with a P-row halo (or pltpu.roll taps) there.
    assert HW <= 4096, "flat conv operator sized for modest spatial extents"

    # Fold eval-mode BatchNorm into the conv operator (scale) plus one scalar bias.
    # TODO(synk): training-mode BatchNorm (batch statistics + running-stat updates)
    # is not implemented; the kernel uses inference (running-stats) semantics.
    inv_std = 1.0 / jnp.sqrt(jnp.asarray(bn_var, jnp.float32) + eps)
    bn_scale = jnp.asarray(bn_gamma, jnp.float32) * inv_std                        # (1,)
    bn_bias = (jnp.asarray(bn_beta, jnp.float32)
               - jnp.asarray(bn_mean, jnp.float32) * bn_scale).reshape(1)          # (1,) f32
    cm_avg, cm_max = _conv_bn_operators(conv_w, bn_scale, H, W)                    # (HW, HW) f32 each

    # Lane-dense layout for the heavy path (cheap XLA reshape on the host side).
    x_flat = x.reshape(B, C, HW)
    itemsize = x.dtype.itemsize
    bt = _choose_batch_tile(B, C * HW * itemsize)
    grid = (B // bt,)
    block_bytes = bt * C * HW * itemsize
    resident_bytes = 2 * HW * HW * 4        # the two VMEM-resident conv operators

    cost = pl.CostEstimate(
        flops=int(B * HW * (3 * C + 4 * HW + 8)),
        transcendentals=int(B * HW),
        bytes_accessed=int(2 * B * C * HW * itemsize + resident_bytes + 4),
    )

    y_flat = pl.pallas_call(
        _spatial_attention_kernel,
        out_shape=jax.ShapeDtypeStruct((B, C, HW), x.dtype),
        grid_spec=pltpu.PrefetchScalarGridSpec(
            num_scalar_prefetch=0,
            grid=grid,
            in_specs=[
                pl.BlockSpec(memory_space=pltpu.MemorySpace.SMEM),       # BN bias scalar
                pl.BlockSpec((HW, HW), lambda b: (0, 0)),                # conv op (avg ch), resident
                pl.BlockSpec((HW, HW), lambda b: (0, 0)),                # conv op (max ch), resident
                pl.BlockSpec((bt, C, HW), lambda b: (b, 0, 0)),          # x (lane-dense)
            ],
            out_specs=pl.BlockSpec((bt, C, HW), lambda b: (b, 0, 0)),
        ),
        compiler_params=pltpu.CompilerParams(
            dimension_semantics=("parallel",),
            # Cap well below the smallest physical VMEM (v7x: 64 MiB per TensorCore).
            vmem_limit_bytes=int(min(48 << 20,
                                     max(16 << 20,
                                         4 * block_bytes + resident_bytes + (4 << 20)))),
        ),
        cost_estimate=cost,
    )(bn_bias, cm_avg, cm_max, x_flat)

    return y_flat.reshape(B, C, H, W)


def spatial_attention_ref(x, conv_w, bn_gamma, bn_beta, bn_mean, bn_var, eps=1e-5):
    # Pure-JAX reference mirroring the PyTorch forward (eval-mode BatchNorm).
    avg = jnp.mean(x, axis=1, keepdims=True)
    mx = jnp.max(x, axis=1, keepdims=True)
    pooled = jnp.concatenate([avg, mx], axis=1)              # (B, 2, H, W)
    conv = jax.lax.conv_general_dilated(
        pooled.astype(jnp.float32), conv_w.astype(jnp.float32),
        window_strides=(1, 1), padding="SAME",
        dimension_numbers=("NCHW", "OIHW", "NCHW"),
        precision=jax.lax.Precision.HIGHEST)                 # (B, 1, H, W)
    g = bn_gamma.reshape(1, 1, 1, 1)
    b = bn_beta.reshape(1, 1, 1, 1)
    m = bn_mean.reshape(1, 1, 1, 1)
    v = bn_var.reshape(1, 1, 1, 1)
    bn = (conv - m) / jnp.sqrt(v + eps) * g + b
    return x * jax.nn.sigmoid(bn)


if __name__ == "__main__":
    B, C, H, W = 2, 4, 16, 16
    K = 7  # kernel_size in (3, 7)

    key = jax.random.PRNGKey(0)
    kx, kw, kg, kb, km, kv = jax.random.split(key, 6)

    x = jax.random.normal(kx, (B, C, H, W), dtype=jnp.float32)
    conv_w = 0.1 * jax.random.normal(kw, (1, 2, K, K), dtype=jnp.float32)   # Conv2d(2,1,K).weight
    bn_gamma = 1.0 + 0.1 * jax.random.normal(kg, (1,), dtype=jnp.float32)
    bn_beta = 0.1 * jax.random.normal(kb, (1,), dtype=jnp.float32)
    bn_mean = 0.1 * jax.random.normal(km, (1,), dtype=jnp.float32)
    bn_var = jnp.abs(1.0 + 0.1 * jax.random.normal(kv, (1,), dtype=jnp.float32))

    y = spatial_attention(x, conv_w, bn_gamma, bn_beta, bn_mean, bn_var)
    y = jax.block_until_ready(y)

    y_ref = spatial_attention_ref(x, conv_w, bn_gamma, bn_beta, bn_mean, bn_var)
    assert y.shape == x.shape
    # Tolerance documents/covers possible reduced-precision (bf16-pass) f32
    # matmuls on the MXU for the tiny conv operator; all elementwise paths are
    # exact f32, and layout/indexing bugs would show as O(0.1-1) errors.
    max_err = jnp.max(jnp.abs(y - y_ref))
    assert jnp.allclose(y, y_ref, atol=3e-3, rtol=3e-3), f"mismatch vs reference (max abs err {max_err})"

    print("KERNEL_OK")
</pallas_src>

<mosaic_0001>
module attributes {stable_mosaic.version = 11 : i64} {
  func.func @_spatial_attention_kernel(%arg0: i32, %arg1: memref<1xf32, #tpu.memory_space<smem>>, %arg2: memref<256x256xf32, #tpu.memory_space<vmem>>, %arg3: memref<256x256xf32, #tpu.memory_space<vmem>>, %arg4: memref<1x4x256xf32, #tpu.memory_space<vmem>>, %arg5: memref<1x4x256xf32, #tpu.memory_space<vmem>>) attributes {dimension_semantics = [#tpu.dimension_semantics<parallel>], iteration_bounds = array<i64: 2>, scalar_prefetch = 0 : i64, scratch_operands = 0 : i64, tpu.core_type = #tpu.core_type<tc>, window_params = [{transform_indices = @transform_0, window_bounds = array<i64: 1>}, {pipeline_mode = #tpu.pipeline_mode<synchronous>, transform_indices = @transform_1, window_bounds = array<i64: 256, 256>}, {pipeline_mode = #tpu.pipeline_mode<synchronous>, transform_indices = @transform_2, window_bounds = array<i64: 256, 256>}, {transform_indices = @transform_3, window_bounds = array<i64: 1, 4, 256>}, {transform_indices = @transform_4, window_bounds = array<i64: 1, 4, 256>}]} {
    %c0 = arith.constant 0 : index
    %c0_0 = arith.constant 0 : index
    %c0_1 = arith.constant 0 : index
    %0 = vector.load %arg4[%c0, %c0_0, %c0_1] : memref<1x4x256xf32, #tpu.memory_space<vmem>>, vector<1x4x256xf32>
    %cst = arith.constant dense<0.000000e+00> : vector<1x256xf32>
    %1 = vector.multi_reduction <add>, %0, %cst [1] : vector<1x4x256xf32> to vector<1x256xf32>
    %cst_2 = arith.constant 2.500000e-01 : f32
    %2 = vector.broadcast %cst_2 : f32 to vector<1x256xf32>
    %3 = arith.mulf %1, %2 : vector<1x256xf32>
    %cst_3 = arith.constant dense<0xFF800000> : vector<1x256xf32>
    %4 = vector.multi_reduction <maximumf>, %0, %cst_3 [1] : vector<1x4x256xf32> to vector<1x256xf32>
    %c0_4 = arith.constant 0 : index
    %c0_5 = arith.constant 0 : index
    %5 = vector.load %arg2[%c0_4, %c0_5] : memref<256x256xf32, #tpu.memory_space<vmem>>, vector<256x256xf32>
    %cst_6 = arith.constant dense<0.000000e+00> : vector<1x256xf32>
    %6 = tpu.matmul %3, %5, %cst_6 {dimension_numbers = #tpu.dot_dimension_numbers<[1], [0], [0], [1], [0, 0, 1, 1], [], []>} : vector<1x256xf32>, vector<256x256xf32>, vector<1x256xf32> -> vector<1x256xf32>
    %c0_7 = arith.constant 0 : index
    %c0_8 = arith.constant 0 : index
    %7 = vector.load %arg3[%c0_7, %c0_8] : memref<256x256xf32, #tpu.memory_space<vmem>>, vector<256x256xf32>
    %cst_9 = arith.constant dense<0.000000e+00> : vector<1x256xf32>
    %8 = tpu.matmul %4, %7, %cst_9 {dimension_numbers = #tpu.dot_dimension_numbers<[1], [0], [0], [1], [0, 0, 1, 1], [], []>} : vector<1x256xf32>, vector<256x256xf32>, vector<1x256xf32> -> vector<1x256xf32>
    %9 = arith.addf %6, %8 : vector<1x256xf32>
    %c0_10 = arith.constant 0 : index
    %10 = memref.load %arg1[%c0_10] : memref<1xf32, #tpu.memory_space<smem>>
    %11 = vector.broadcast %10 : f32 to vector<1x256xf32>
    %12 = arith.addf %9, %11 : vector<1x256xf32>
    %cst_11 = arith.constant 0.000000e+00 : f32
    %13 = vector.broadcast %cst_11 : f32 to vector<1x256xf32>
    %14 = arith.subf %13, %12 : vector<1x256xf32>
    %15 = math.exp %14 : vector<1x256xf32>
    %cst_12 = arith.constant 1.000000e+00 : f32
    %16 = vector.broadcast %cst_12 : f32 to vector<1x256xf32>
    %17 = arith.addf %16, %15 : vector<1x256xf32>
    %cst_13 = arith.constant 1.000000e+00 : f32
    %18 = vector.broadcast %cst_13 : f32 to vector<1x256xf32>
    %19 = arith.divf %18, %17 : vector<1x256xf32>
    %c0_14 = arith.constant 0 : index
    %c0_15 = arith.constant 0 : index
    %c0_16 = arith.constant 0 : index
    %20 = vector.load %arg4[%c0_14, %c0_15, %c0_16] : memref<1x4x256xf32, #tpu.memory_space<vmem>>, vector<1x4x256xf32>
    %21 = vector.shape_cast %19 : vector<1x256xf32> to vector<1x1x256xf32>
    %22 = vector.broadcast %21 : vector<1x1x256xf32> to vector<1x4x256xf32>
    %23 = arith.mulf %20, %22 : vector<1x4x256xf32>
    %c0_17 = arith.constant 0 : index
    %c0_18 = arith.constant 0 : index
    %c0_19 = arith.constant 0 : index
    %24 = vector.load %arg5[%c0_17, %c0_18, %c0_19] : memref<1x4x256xf32, #tpu.memory_space<vmem>>, vector<1x4x256xf32>
    tpu.vector_store %arg5[%c0_17, %c0_18, %c0_19], %23 {strides = array<i32>} : memref<1x4x256xf32, #tpu.memory_space<vmem>>, vector<1x4x256xf32>,
    return
  }
  func.func @transform_0(%arg0: i32) -> i32 {
    %c0_i32 = arith.constant 0 : i32
    %c0_i32_0 = arith.constant 0 : i32
    return %c0_i32 : i32
  }
  func.func @transform_1(%arg0: i32) -> (i32, i32) {
    %c0_i32 = arith.constant 0 : i32
    %c0_i32_0 = arith.constant 0 : i32
    %c0_i32_1 = arith.constant 0 : i32
    return %c0_i32, %c0_i32_0 : i32, i32
  }
  func.func @transform_2(%arg0: i32) -> (i32, i32) {
    %c0_i32 = arith.constant 0 : i32
    %c0_i32_0 = arith.constant 0 : i32
    %c0_i32_1 = arith.constant 0 : i32
    return %c0_i32, %c0_i32_0 : i32, i32
  }
  func.func @transform_3(%arg0: i32) -> (i32, i32, i32) {
    %c0_i32 = arith.constant 0 : i32
    %c0_i32_0 = arith.constant 0 : i32
    %c0_i32_1 = arith.constant 0 : i32
    return %arg0, %c0_i32, %c0_i32_0 : i32, i32, i32
  }
  func.func @transform_4(%arg0: i32) -> (i32, i32, i32) {
    %c0_i32 = arith.constant 0 : i32
    %c0_i32_0 = arith.constant 0 : i32
    %c0_i32_1 = arith.constant 0 : i32
    return %arg0, %c0_i32, %c0_i32_0 : i32, i32, i32
  }
}

</mosaic_0001>

<llo_original>
// kernel: tpu_custom_call.1
$region0: #{tpu_custom_call.1}
  #allocation0 [shape = 'u32[]', space=smem, size = 0x4, offset = 0x4, fixed_abs, tag = 'smem constant byte address 0x4 - core index']
  #allocation1 [shape = 'u32[144,128]{1,0:T(1,128)}', space=vmem, size = 0x12000, scoped, tag = 'internal scratch']
  #allocation2 [shape = 'f32[1]{0:T(128)S(6)}', space=smem, size = 0x200, scoped, tag = 'scoped memory for tpu_custom_call.1']
  %s0 = inlined_call_operand.<no memory space> [shape: f32[1], index: 0, kind: input, shape index: {}]
  %s1 = inlined_call_operand.hbm [shape: f32[256,256], index: 1, kind: input, shape index: {}]
  %s2 = inlined_call_operand.hbm [shape: f32[256,256], index: 2, kind: input, shape index: {}]
  %s3 = inlined_call_operand.hbm [shape: f32[2,4,256], index: 3, kind: input, shape index: {}]
  %s4 = inlined_call_operand.hbm [shape: f32[2,4,256], index: 4, kind: output, shape index: {}]
  %s5 = sld [smem:[#allocation0]]
  $region61: #{tpu_custom_call.1} parent=0
    _
  %s7 = ssub.s32 1, %s5
  %s8 = scalar_select 0, %s7, %s5
  %9 = sst [smem:[#allocation2]] %s0
  $region1: #{tpu_custom_call.1} parent=0
    #allocation3 [shape = 'u8[262144]{0}', space=vmem, size = 0x40000, scoped, tag = 'input window, operand 1, single buffered']
    #allocation4 [shape = 's32[2]{0}', space=sflag, size = 0x8, scoped, tag = 'scoped memory for tpu_custom_call.1']
    #allocation5 [shape = 's32[2]{0}', space=sflag, size = 0x8, scoped, tag = 'scoped memory for tpu_custom_call.1']
    #allocation6 [shape = 'u8[262144]{0}', space=vmem, size = 0x40000, scoped, tag = 'input window, operand 2, single buffered']
    #allocation7 [shape = 's32[1]{0}', space=sflag, size = 0x4, scoped, tag = 'scoped memory for tpu_custom_call.1']
    #allocation8 [shape = 'u8[8192]{0}', space=vmem, size = 0x2000, scoped, tag = 'input window, operand 3']
    #allocation9 [shape = 'u8[8192]{0}', space=vmem, size = 0x2000, scoped, tag = 'output window, operand 0']
    %10 = vsyncpa [#allocation4], 0
    %11 = vsyncpa [#allocation7], 0
    %12 = vsyncpa [#allocation5], 0
    %s13 = scalar_lea.sflag [#allocation5], 1
    %14 = vsyncpa %s13, 0
    loop: start=0, step=1, limit=4
    $region2: #{tpu_custom_call.1} parent=1 // loop_pre_header
      _
    $region3: #{tpu_custom_call.1} parent=1 // loop_header
      %s16 = sphi 0, %s20
      %p17 = scmp.ge.s32.totalorder %s16, 4
      %s24 = sphi 0, %s24
      %s26 = sphi 0, %s24
      %s27 = sphi 0, %s26
      %s41 = sphi 0, %s27
      %s45 = sphi 0, %s45
      %s47 = sphi 0, %s45
      %s48 = sphi 0, %s47
      %s62 = sphi 0, %s48
      %s66 = sphi 0, %s66
      %s68 = sphi 0, %s66
      %s69 = sphi 0, %s68
      %s83 = sphi 0, %s69
      %s89 = sphi 0, %s91
      %s92 = sphi 0, %s89
      %s93 = sphi 0, %s92
      %s109 = sphi 0, %s93
      %s115 = sphi 0, %s117
      %s118 = sphi 0, %s115
      %s119 = sphi 0, %s118
      %s135 = sphi 0, %s119
    $region4: #{tpu_custom_call.1} parent=1 // loop_header_branch
      %19 = sbr.rel (%p17) target = $region8
    $region5: #{tpu_custom_call.1} parent=1 // loop_body
      %s21 = ssub.s32 %s16, 1
      %s22 = ssub.s32 %s16, 2
      %s23 = sadd.s32 %s16, 1
      %s25 = sadd.s32 %s24, 1
      %p28 = scmp.eq.s32.totalorder %s16, 1
      %p29 = scmp.ne.s32.totalorder %s24, %s26
      %p30 = scmp.eq.s32.totalorder %s16, 0
      %p31 = por %p29, %p30
      %p32 = scmp.ne.s32.totalorder %s24, %s26
      %p33 = scmp.eq.s32.totalorder %s21, 1
      %p34 = por %p32, %p33
      %p35 = scmp.ne.s32.totalorder %s26, %s27
      %p36 = scmp.eq.s32.totalorder %s21, 0
      %p37 = por %p35, %p36
      %p38 = scmp.ne.s32.totalorder %s26, %s27
      %p39 = scmp.eq.s32.totalorder %s22, 1
      %p40 = por %p38, %p39
      %p42 = scmp.ne.s32.totalorder %s27, %s41
      %p43 = scmp.eq.s32.totalorder %s22, 0
      %p44 = por %p42, %p43
      %s46 = sadd.s32 %s45, 1
      %p49 = scmp.eq.s32.totalorder %s16, 1
      %p50 = scmp.ne.s32.totalorder %s45, %s47
      %p51 = scmp.eq.s32.totalorder %s16, 0
      %p52 = por %p50, %p51
      %p53 = scmp.ne.s32.totalorder %s45, %s47
      %p54 = scmp.eq.s32.totalorder %s21, 1
      %p55 = por %p53, %p54
      %p56 = scmp.ne.s32.totalorder %s47, %s48
      %p57 = scmp.eq.s32.totalorder %s21, 0
      %p58 = por %p56, %p57
      %p59 = scmp.ne.s32.totalorder %s47, %s48
      %p60 = scmp.eq.s32.totalorder %s22, 1
      %p61 = por %p59, %p60
      %p63 = scmp.ne.s32.totalorder %s48, %s62
      %p64 = scmp.eq.s32.totalorder %s22, 0
      %p65 = por %p63, %p64
      %s67 = sadd.s32 %s66, 1
      %p70 = scmp.eq.s32.totalorder %s16, 1
      %p71 = scmp.ne.s32.totalorder %s66, %s68
      %p72 = scmp.eq.s32.totalorder %s16, 0
      %p73 = por %p71, %p72
      %p74 = scmp.ne.s32.totalorder %s66, %s68
      %p75 = scmp.eq.s32.totalorder %s21, 1
      %p76 = por %p74, %p75
      %p77 = scmp.ne.s32.totalorder %s68, %s69
      %p78 = scmp.eq.s32.totalorder %s21, 0
      %p79 = por %p77, %p78
      %p80 = scmp.ne.s32.totalorder %s68, %s69
      %p81 = scmp.eq.s32.totalorder %s22, 1
      %p82 = por %p80, %p81
      %p84 = scmp.ne.s32.totalorder %s69, %s83
      %p85 = scmp.eq.s32.totalorder %s22, 0
      %p86 = por %p84, %p85
      %s87 = ssub.s32 %s16, %s23
      %p88 = scmp.eq.s32.totalorder %s87, 0
      %s90 = sadd.s32 %s89, 1
      %s91 = scalar_select %p88, %s89, %s90
      %p94 = pneg %p88
      %p95 = scmp.eq.s32.totalorder %s16, 1
      %p96 = por %p94, %p95
      %p97 = scmp.ne.s32.totalorder %s89, %s92
      %p98 = scmp.eq.s32.totalorder %s16, 0
      %p99 = por %p97, %p98
      %p100 = scmp.ne.s32.totalorder %s89, %s92
      %p101 = scmp.eq.s32.totalorder %s21, 1
      %p102 = por %p100, %p101
      %p103 = scmp.ne.s32.totalorder %s92, %s93
      %p104 = scmp.eq.s32.totalorder %s21, 0
      %p105 = por %p103, %p104
      %p106 = scmp.ne.s32.totalorder %s92, %s93
      %p107 = scmp.eq.s32.totalorder %s22, 1
      %p108 = por %p106, %p107
      %p110 = scmp.ne.s32.totalorder %s93, %s109
      %p111 = scmp.eq.s32.totalorder %s22, 0
      %p112 = por %p110, %p111
      %s113 = ssub.s32 %s16, %s23
      %p114 = scmp.eq.s32.totalorder %s113, 0
      %s116 = sadd.s32 %s115, 1
      %s117 = scalar_select %p114, %s115, %s116
      %p120 = pneg %p114
      %p121 = scmp.eq.s32.totalorder %s16, 1
      %p122 = por %p120, %p121
      %p123 = scmp.ne.s32.totalorder %s115, %s118
      %p124 = scmp.eq.s32.totalorder %s16, 0
      %p125 = por %p123, %p124
      %p126 = scmp.ne.s32.totalorder %s115, %s118
      %p127 = scmp.eq.s32.totalorder %s21, 1
      %p128 = por %p126, %p127
      %p129 = scmp.ne.s32.totalorder %s118, %s119
      %p130 = scmp.eq.s32.totalorder %s21, 0
      %p131 = por %p129, %p130
      %p132 = scmp.ne.s32.totalorder %s118, %s119
      %p133 = scmp.eq.s32.totalorder %s22, 1
      %p134 = por %p132, %p133
      %p136 = scmp.ne.s32.totalorder %s119, %s135
      %p137 = scmp.eq.s32.totalorder %s22, 0
      %p138 = por %p136, %p137
      %p139 = scmp.le.s32.totalorder 1, %s16
      %p140 = scmp.lt.s32.totalorder %s16, 3
      %p141 = pnand %p139, %p140
      %p142 = pneg %p141
      // Predicated region
      $region9: #{tpu_custom_call.1} parent=5 // pred_check
        _
      $region10: #{tpu_custom_call.1} parent=5 // pred_check_branch
        %144 = sbr.rel (%p141) target = $region12
      $region11: #{tpu_custom_call.1} parent=5 // pred_region
        %s145 = ssub.s32 %s16, 1
        // Predicated region
        $region13: #{tpu_custom_call.1} parent=11 // pred_check
          %p146 = pneg %p37
        $region14: #{tpu_custom_call.1} parent=11 // pred_check_branch
          %148 = sbr.rel (%p146) target = $region16
        $region15: #{tpu_custom_call.1} parent=11 // pred_region
          _
        $region16: #{tpu_custom_call.1} parent=11 // pred_fallthru
          _
        // Predicated region
        $region17: #{tpu_custom_call.1} parent=11 // pred_check
          %p149 = pneg %p58
        $region18: #{tpu_custom_call.1} parent=11 // pred_check_branch
          %151 = sbr.rel (%p149) target = $region20
        $region19: #{tpu_custom_call.1} parent=11 // pred_region
          %s153 = ssub.s32 8192, 8192
          %154 = vsyncadd [#allocation4], %s153
          %s155 = sshll.u32 [#allocation3], 4
          %s156 = int_to_ptr.vmem [resolvable:$true] %s155
          %161 = dma.hbm_to_vmem [thread:$0]  %s1, 8192, %s156, [#allocation4], 256, 256, 16
        $region20: #{tpu_custom_call.1} parent=11 // pred_fallthru
          _
        // Predicated region
        $region21: #{tpu_custom_call.1} parent=11 // pred_check
          %p162 = pneg %p79
        $region22: #{tpu_custom_call.1} parent=11 // pred_check_branch
          %164 = sbr.rel (%p162) target = $region24
        $region23: #{tpu_custom_call.1} parent=11 // pred_region
          %s166 = ssub.s32 8192, 8192
          %167 = vsyncadd [#allocation7], %s166
          %s168 = sshll.u32 [#allocation6], 4
          %s169 = int_to_ptr.vmem [resolvable:$true] %s168
          %174 = dma.hbm_to_vmem [thread:$0]  %s2, 8192, %s169, [#allocation7], 256, 256, 16
        $region24: #{tpu_custom_call.1} parent=11 // pred_fallthru
          _
      $region12: #{tpu_custom_call.1} parent=5 // pred_fallthru
        _
      %p175 = scmp.lt.s32.totalorder %s16, 2
      // Predicated region
      $region25: #{tpu_custom_call.1} parent=5 // pred_check
        %p176 = pneg %p175
      $region26: #{tpu_custom_call.1} parent=5 // pred_check_branch
        %178 = sbr.rel (%p176) target = $region28
      $region27: #{tpu_custom_call.1} parent=5 // pred_region
        // Predicated region
        $region29: #{tpu_custom_call.1} parent=27 // pred_check
          %p179 = pneg %p99
        $region30: #{tpu_custom_call.1} parent=27 // pred_check_branch
          %181 = sbr.rel (%p179) target = $region32
        $region31: #{tpu_custom_call.1} parent=27 // pred_region
          %s182 = sand.u32 %s16, 1
          %s183 = scalar_lea.sflag [#allocation4], %s182
          %s184 = sand.u32 %s89, 1
          %s185 = smul.addr %s184, 8
          %s186 = scalar_lea.vmem [#allocation8], %s185
          %s188 = ssub.s32 128, 128
          %189 = vsyncadd %s183, %s188
          %s190 = smul.addr %s16, 2
          %s191 = smul.addr %s190, 64
          %s192 = scalar_lea.hbm %s3, %s191
          %s194 = sshll.u32 %s186, 4
          %s195 = int_to_ptr.vmem [resolvable:$true] %s194
          %197 = dma.hbm_to_vmem [thread:$0]  %s192, 128, %s195, %s183
        $region32: #{tpu_custom_call.1} parent=27 // pred_fallthru
          _
      $region28: #{tpu_custom_call.1} parent=5 // pred_fallthru
        _
      %p198 = scmp.le.s32.totalorder 1, %s16
      %p199 = scmp.lt.s32.totalorder %s16, 3
      %p200 = pnand %p198, %p199
      %p201 = pneg %p200
      // Predicated region
      $region33: #{tpu_custom_call.1} parent=5 // pred_check
        _
      $region34: #{tpu_custom_call.1} parent=5 // pred_check_branch
        %203 = sbr.rel (%p200) target = $region36
      $region35: #{tpu_custom_call.1} parent=5 // pred_region
        %s204 = ssub.s32 %s16, 1
        // Predicated region
        $region37: #{tpu_custom_call.1} parent=35 // pred_check
          %p205 = pneg %p58
        $region38: #{tpu_custom_call.1} parent=35 // pred_check_branch
          %207 = sbr.rel (%p205) target = $region40
        $region39: #{tpu_custom_call.1} parent=35 // pred_region
          %208 = dma.done [#allocation4], 8192
        $region40: #{tpu_custom_call.1} parent=35 // pred_fallthru
          _
        // Predicated region
        $region41: #{tpu_custom_call.1} parent=35 // pred_check
          %p209 = pneg %p79
        $region42: #{tpu_custom_call.1} parent=35 // pred_check_branch
          %211 = sbr.rel (%p209) target = $region44
        $region43: #{tpu_custom_call.1} parent=35 // pred_region
          %212 = dma.done [#allocation7], 8192
        $region44: #{tpu_custom_call.1} parent=35 // pred_fallthru
          _
        %s213 = sand.u32 %s21, 1
        %s214 = scalar_lea.sflag [#allocation4], %s213
        %s215 = sand.u32 %s92, 1
        %s216 = smul.addr %s215, 8
        %s217 = scalar_lea.vmem [#allocation8], %s216
        // Predicated region
        $region45: #{tpu_custom_call.1} parent=35 // pred_check
          %p218 = pneg %p105
        $region46: #{tpu_custom_call.1} parent=35 // pred_check_branch
          %220 = sbr.rel (%p218) target = $region48
        $region47: #{tpu_custom_call.1} parent=35 // pred_region
          %221 = dma.done %s214, 128
        $region48: #{tpu_custom_call.1} parent=35 // pred_fallthru
          _
        %p222 = pneg %p37
        %p223 = pneg %p34
        %p224 = pneg %p58
        %p225 = pneg %p55
        %p226 = pneg %p79
        %p227 = pneg %p76
        %s228 = sand.u32 %s21, 1
        %s229 = scalar_lea.sflag [#allocation4], %s228
        %s230 = sand.u32 %s92, 1
        %s231 = smul.addr %s230, 8
        %s232 = scalar_lea.vmem [#allocation8], %s231
        %p233 = pneg %p105
        %p234 = pneg %p102
        %p235 = pneg %p131
        %p236 = pneg %p128
        %s237 = sand.u32 %s118, 1
        %s238 = scalar_lea.sflag [#allocation5], %s237
        %s239 = sand.u32 %s118, 1
        %s240 = smul.addr %s239, 8
        %s241 = scalar_lea.vmem [#allocation9], %s240
        %v242 = vld [vmem:[%s217] sm:$0xff]
        %v244 = vcombine.high %v242, %v242
        %vm246 = vcmask 1043456
        %v247 = vsel %vm246, %v242, 0.0
        %v248 = vrot.slane %v247, 4
        %v249 = vadd.f32 %v247, %v248
        %v250 = vrot.slane %v249, 2
        %v251 = vadd.f32 %v249, %v250
        %v252 = vrot.slane %v251, 1
        %v253 = vadd.f32 %v251, %v252
        %v254 = vsel %vm246, %v244, 0.0
        %v255 = vrot.slane %v254, 4
        %v256 = vadd.f32 %v254, %v255
        %v257 = vrot.slane %v256, 2
        %v258 = vadd.f32 %v256, %v257
        %v259 = vrot.slane %v258, 1
        %v260 = vadd.f32 %v258, %v259
        %v261 = vmul.f32 %v253, 0.25
        %v262 = vmul.f32 %v260, 0.25
        %v263 = vsel %vm246, %v242, -inf
        %v264 = vrot.slane %v263, 4
        %v265 = vmax.f32 %v263, %v264
        %v266 = vrot.slane %v265, 2
        %v267 = vmax.f32 %v265, %v266
        %v268 = vrot.slane %v267, 1
        %v269 = vmax.f32 %v267, %v268
        %v270 = vsel %vm246, %v244, -inf
        %v271 = vrot.slane %v270, 4
        %v272 = vmax.f32 %v270, %v271
        %v273 = vrot.slane %v272, 2
        %v274 = vmax.f32 %v272, %v273
        %v275 = vrot.slane %v274, 1
        %v276 = vmax.f32 %v274, %v275
        %v277 = vld [vmem:[#allocation3] sm:$0xff]
        %v278 = vld [vmem:[#allocation3 + $0x8] sm:$0xff]
        %v279 = vld [vmem:[#allocation3 + $0x10] sm:$0xff]
        %v280 = vld [vmem:[#allocation3 + $0x18] sm:$0xff]
        %v281 = vld [vmem:[#allocation3 + $0x20] sm:$0xff]
        %v282 = vld [vmem:[#allocation3 + $0x28] sm:$0xff]
        %v283 = vld [vmem:[#allocation3 + $0x30] sm:$0xff]
        %v284 = vld [vmem:[#allocation3 + $0x38] sm:$0xff]
        %v285 = vld [vmem:[#allocation3 + $0x40] sm:$0xff]
        %v286 = vld [vmem:[#allocation3 + $0x48] sm:$0xff]
        %v287 = vld [vmem:[#allocation3 + $0x50] sm:$0xff]
        %v288 = vld [vmem:[#allocation3 + $0x58] sm:$0xff]
        %v289 = vld [vmem:[#allocation3 + $0x60] sm:$0xff]
        %v290 = vld [vmem:[#allocation3 + $0x68] sm:$0xff]
        %v291 = vld [vmem:[#allocation3 + $0x70] sm:$0xff]
        %v292 = vld [vmem:[#allocation3 + $0x78] sm:$0xff]
        %v293 = vld [vmem:[#allocation3 + $0x80] sm:$0xff]
        %v294 = vld [vmem:[#allocation3 + $0x88] sm:$0xff]
        %v295 = vld [vmem:[#allocation3 + $0x90] sm:$0xff]
        %v296 = vld [vmem:[#allocation3 + $0x98] sm:$0xff]
        %v297 = vld [vmem:[#allocation3 + $0xa0] sm:$0xff]
        %v298 = vld [vmem:[#allocation3 + $0xa8] sm:$0xff]
        %v299 = vld [vmem:[#allocation3 + $0xb0] sm:$0xff]
        %v300 = vld [vmem:[#allocation3 + $0xb8] sm:$0xff]
        %v301 = vld [vmem:[#allocation3 + $0xc0] sm:$0xff]
        %v302 = vld [vmem:[#allocation3 + $0xc8] sm:$0xff]
        %v303 = vld [vmem:[#allocation3 + $0xd0] sm:$0xff]
        %v304 = vld [vmem:[#allocation3 + $0xd8] sm:$0xff]
        %v305 = vld [vmem:[#allocation3 + $0xe0] sm:$0xff]
        %v306 = vld [vmem:[#allocation3 + $0xe8] sm:$0xff]
        %v307 = vld [vmem:[#allocation3 + $0xf0] sm:$0xff]
        %v308 = vld [vmem:[#allocation3 + $0xf8] sm:$0xff]
        %v309 = vld [vmem:[#allocation3 + $0x100] sm:$0xff]
        %v310 = vld [vmem:[#allocation3 + $0x108] sm:$0xff]
        %v311 = vld [vmem:[#allocation3 + $0x110] sm:$0xff]
        %v312 = vld [vmem:[#allocation3 + $0x118] sm:$0xff]
        %v313 = vld [vmem:[#allocation3 + $0x120] sm:$0xff]
        %v314 = vld [vmem:[#allocation3 + $0x128] sm:$0xff]
        %v315 = vld [vmem:[#allocation3 + $0x130] sm:$0xff]
        %v316 = vld [vmem:[#allocation3 + $0x138] sm:$0xff]
        %v317 = vld [vmem:[#allocation3 + $0x140] sm:$0xff]
        %v318 = vld [vmem:[#allocation3 + $0x148] sm:$0xff]
        %v319 = vld [vmem:[#allocation3 + $0x150] sm:$0xff]
        %v320 = vld [vmem:[#allocation3 + $0x158] sm:$0xff]
        %v321 = vld [vmem:[#allocation3 + $0x160] sm:$0xff]
        %v322 = vld [vmem:[#allocation3 + $0x168] sm:$0xff]
        %v323 = vld [vmem:[#allocation3 + $0x170] sm:$0xff]
        %v324 = vld [vmem:[#allocation3 + $0x178] sm:$0xff]
        %v325 = vld [vmem:[#allocation3 + $0x180] sm:$0xff]
        %v326 = vld [vmem:[#allocation3 + $0x188] sm:$0xff]
        %v327 = vld [vmem:[#allocation3 + $0x190] sm:$0xff]
        %v328 = vld [vmem:[#allocation3 + $0x198] sm:$0xff]
        %v329 = vld [vmem:[#allocation3 + $0x1a0] sm:$0xff]
        %v330 = vld [vmem:[#allocation3 + $0x1a8] sm:$0xff]
        %v331 = vld [vmem:[#allocation3 + $0x1b0] sm:$0xff]
        %v332 = vld [vmem:[#allocation3 + $0x1b8] sm:$0xff]
        %v333 = vld [vmem:[#allocation3 + $0x1c0] sm:$0xff]
        %v334 = vld [vmem:[#allocation3 + $0x1c8] sm:$0xff]
        %v335 = vld [vmem:[#allocation3 + $0x1d0] sm:$0xff]
        %v336 = vld [vmem:[#allocation3 + $0x1d8] sm:$0xff]
        %v337 = vld [vmem:[#allocation3 + $0x1e0] sm:$0xff]
        %v338 = vld [vmem:[#allocation3 + $0x1e8] sm:$0xff]
        %v339 = vld [vmem:[#allocation3 + $0x1f0] sm:$0xff]
        %v340 = vld [vmem:[#allocation3 + $0x1f8] sm:$0xff]
        %v341 = vld [vmem:[#allocation6] sm:$0xff]
        %v342 = vld [vmem:[#allocation6 + $0x8] sm:$0xff]
        %v343 = vld [vmem:[#allocation6 + $0x10] sm:$0xff]
        %v344 = vld [vmem:[#allocation6 + $0x18] sm:$0xff]
        %v345 = vld [vmem:[#allocation6 + $0x20] sm:$0xff]
        %v346 = vld [vmem:[#allocation6 + $0x28] sm:$0xff]
        %v347 = vld [vmem:[#allocation6 + $0x30] sm:$0xff]
        %v348 = vld [vmem:[#allocation6 + $0x38] sm:$0xff]
        %v349 = vld [vmem:[#allocation6 + $0x40] sm:$0xff]
        %v350 = vld [vmem:[#allocation6 + $0x48] sm:$0xff]
        %v351 = vld [vmem:[#allocation6 + $0x50] sm:$0xff]
        %v352 = vld [vmem:[#allocation6 + $0x58] sm:$0xff]
        %v353 = vld [vmem:[#allocation6 + $0x60] sm:$0xff]
        %v354 = vld [vmem:[#allocation6 + $0x68] sm:$0xff]
        %v355 = vld [vmem:[#allocation6 + $0x70] sm:$0xff]
        %v356 = vld [vmem:[#allocation6 + $0x78] sm:$0xff]
        %v357 = vld [vmem:[#allocation6 + $0x80] sm:$0xff]
        %v358 = vld [vmem:[#allocation6 + $0x88] sm:$0xff]
        %v359 = vld [vmem:[#allocation6 + $0x90] sm:$0xff]
        %v360 = vld [vmem:[#allocation6 + $0x98] sm:$0xff]
        %v361 = vld [vmem:[#allocation6 + $0xa0] sm:$0xff]
        %v362 = vld [vmem:[#allocation6 + $0xa8] sm:$0xff]
        %v363 = vld [vmem:[#allocation6 + $0xb0] sm:$0xff]
        %v364 = vld [vmem:[#allocation6 + $0xb8] sm:$0xff]
        %v365 = vld [vmem:[#allocation6 + $0xc0] sm:$0xff]
        %v366 = vld [vmem:[#allocation6 + $0xc8] sm:$0xff]
        %v367 = vld [vmem:[#allocation6 + $0xd0] sm:$0xff]
        %v368 = vld [vmem:[#allocation6 + $0xd8] sm:$0xff]
        %v369 = vld [vmem:[#allocation6 + $0xe0] sm:$0xff]
        %v370 = vld [vmem:[#allocation6 + $0xe8] sm:$0xff]
        %v371 = vld [vmem:[#allocation6 + $0xf0] sm:$0xff]
        %v372 = vld [vmem:[#allocation6 + $0xf8] sm:$0xff]
        %v373 = vld [vmem:[#allocation6 + $0x100] sm:$0xff]
        %v374 = vld [vmem:[#allocation6 + $0x108] sm:$0xff]
        %v375 = vld [vmem:[#allocation6 + $0x110] sm:$0xff]
        %v376 = vld [vmem:[#allocation6 + $0x118] sm:$0xff]
        %v377 = vld [vmem:[#allocation6 + $0x120] sm:$0xff]
        %v378 = vld [vmem:[#allocation6 + $0x128] sm:$0xff]
        %v379 = vld [vmem:[#allocation6 + $0x130] sm:$0xff]
        %v380 = vld [vmem:[#allocation6 + $0x138] sm:$0xff]
        %v381 = vld [vmem:[#allocation6 + $0x140] sm:$0xff]
        %v382 = vld [vmem:[#allocation6 + $0x148] sm:$0xff]
        %v383 = vld [vmem:[#allocation6 + $0x150] sm:$0xff]
        %v384 = vld [vmem:[#allocation6 + $0x158] sm:$0xff]
        %v385 = vld [vmem:[#allocation6 + $0x160] sm:$0xff]
        %v386 = vld [vmem:[#allocation6 + $0x168] sm:$0xff]
        %v387 = vld [vmem:[#allocation6 + $0x170] sm:$0xff]
        %v388 = vld [vmem:[#allocation6 + $0x178] sm:$0xff]
        %v389 = vld [vmem:[#allocation6 + $0x180] sm:$0xff]
        %v390 = vld [vmem:[#allocation6 + $0x188] sm:$0xff]
        %v391 = vld [vmem:[#allocation6 + $0x190] sm:$0xff]
        %v392 = vld [vmem:[#allocation6 + $0x198] sm:$0xff]
        %v393 = vld [vmem:[#allocation6 + $0x1a0] sm:$0xff]
        %v394 = vld [vmem:[#allocation6 + $0x1a8] sm:$0xff]
        %v395 = vld [vmem:[#allocation6 + $0x1b0] sm:$0xff]
        %v396 = vld [vmem:[#allocation6 + $0x1b8] sm:$0xff]
        %v397 = vld [vmem:[#allocation6 + $0x1c0] sm:$0xff]
        %v398 = vld [vmem:[#allocation6 + $0x1c8] sm:$0xff]
        %v399 = vld [vmem:[#allocation6 + $0x1d0] sm:$0xff]
        %v400 = vld [vmem:[#allocation6 + $0x1d8] sm:$0xff]
        %v401 = vld [vmem:[#allocation6 + $0x1e0] sm:$0xff]
        %v402 = vld [vmem:[#allocation6 + $0x1e8] sm:$0xff]
        %v403 = vld [vmem:[#allocation6 + $0x1f0] sm:$0xff]
        %v404 = vld [vmem:[#allocation6 + $0x1f8] sm:$0xff]
        %405 = vmatprep.subr.mxu0 %v372
        %406 = vmatpush1.msra.mxu0 %v371
        %407 = vmatprep.subr.mxu0 %v370
        %408 = vmatpush1.msra.mxu0 %v369
        %409 = vmatprep.subr.mxu0 %v368
        %410 = vmatpush1.msra.mxu0 %v367
        %411 = vmatprep.subr.mxu0 %v366
        %412 = vmatpush1.msra.mxu0 %v365
        %413 = vmatprep.subr.mxu0 %v364
        %414 = vmatpush1.msra.mxu0 %v363
        %415 = vmatprep.subr.mxu0 %v362
        %416 = vmatpush1.msra.mxu0 %v361
        %417 = vmatprep.subr.mxu0 %v360
        %418 = vmatpush1.msra.mxu0 %v359
        %419 = vmatprep.subr.mxu0 %v358
        %420 = vmatpush1.msra.mxu0 %v357
        %421 = vmatprep.subr.mxu0 %v356
        %422 = vmatpush1.msra.mxu0 %v355
        %423 = vmatprep.subr.mxu0 %v354
        %424 = vmatpush1.msra.mxu0 %v353
        %425 = vmatprep.subr.mxu0 %v352
        %426 = vmatpush1.msra.mxu0 %v351
        %427 = vmatprep.subr.mxu0 %v350
        %428 = vmatpush1.msra.mxu0 %v349
        %429 = vmatprep.subr.mxu0 %v348
        %430 = vmatpush1.msra.mxu0 %v347
        %431 = vmatprep.subr.mxu0 %v346
        %432 = vmatpush1.msra.mxu0 %v345
        %433 = vmatprep.subr.mxu0 %v344
        %434 = vmatpush1.msra.mxu0 %v343
        %435 = vmatprep.subr.mxu0 %v342
        %436 = vmatpush1.msra.mxu0 %v341
        %437 = vmatprep.subr.mxu0 %v404
        %438 = vmatpush2.msra.mxu0 %v403
        %439 = vmatprep.subr.mxu0 %v402
        %440 = vmatpush2.msra.mxu0 %v401
        %441 = vmatprep.subr.mxu0 %v400
        %442 = vmatpush2.msra.mxu0 %v399
        %443 = vmatprep.subr.mxu0 %v398
        %444 = vmatpush2.msra.mxu0 %v397
        %445 = vmatprep.subr.mxu0 %v396
        %446 = vmatpush2.msra.mxu0 %v395
        %447 = vmatprep.subr.mxu0 %v394
        %448 = vmatpush2.msra.mxu0 %v393
        %449 = vmatprep.subr.mxu0 %v392
        %450 = vmatpush2.msra.mxu0 %v391
        %451 = vmatprep.subr.mxu0 %v390
        %452 = vmatpush2.msra.mxu0 %v389
        %453 = vmatprep.subr.mxu0 %v388
        %454 = vmatpush2.msra.mxu0 %v387
        %455 = vmatprep.subr.mxu0 %v386
        %456 = vmatpush2.msra.mxu0 %v385
        %457 = vmatprep.subr.mxu0 %v384
        %458 = vmatpush2.msra.mxu0 %v383
        %459 = vmatprep.subr.mxu0 %v382
        %460 = vmatpush2.msra.mxu0 %v381
        %461 = vmatprep.subr.mxu0 %v380
        %462 = vmatpush2.msra.mxu0 %v379
        %463 = vmatprep.subr.mxu0 %v378
        %464 = vmatpush2.msra.mxu0 %v377
        %465 = vmatprep.subr.mxu0 %v376
        %466 = vmatpush2.msra.mxu0 %v375
        %467 = vmatprep.subr.mxu0 %v374
        %468 = vmatpush2.msra.mxu0 %v373
        %469 = vmatprep.mubr.f32.mxu0 %v276
        %470 = vmatmul.mubr.f32.gmra.mxu0 %v269
        %v471 = vpop.f32.mrf.mxu0
        %v472 = vadd.f32 0.0, %v471
        %v473 = vpop.f32.mrf.mxu0
        %v474 = vadd.f32 0.0, %v473
        %475 = vdwg.mxu0
        %476 = vmatprep.subr.mxu0 %v308
        %477 = vmatpush1.msra.mxu0 %v307
        %478 = vmatprep.subr.mxu0 %v306
        %479 = vmatpush1.msra.mxu0 %v305
        %480 = vmatprep.subr.mxu0 %v304
        %481 = vmatpush1.msra.mxu0 %v303
        %482 = vmatprep.subr.mxu0 %v302
        %483 = vmatpush1.msra.mxu0 %v301
        %484 = vmatprep.subr.mxu0 %v300
        %485 = vmatpush1.msra.mxu0 %v299
        %486 = vmatprep.subr.mxu0 %v298
        %487 = vmatpush1.msra.mxu0 %v297
        %488 = vmatprep.subr.mxu0 %v296
        %489 = vmatpush1.msra.mxu0 %v295
        %490 = vmatprep.subr.mxu0 %v294
        %491 = vmatpush1.msra.mxu0 %v293
        %492 = vmatprep.subr.mxu0 %v292
        %493 = vmatpush1.msra.mxu0 %v291
        %494 = vmatprep.subr.mxu0 %v290
        %495 = vmatpush1.msra.mxu0 %v289
        %496 = vmatprep.subr.mxu0 %v288
        %497 = vmatpush1.msra.mxu0 %v287
        %498 = vmatprep.subr.mxu0 %v286
        %499 = vmatpush1.msra.mxu0 %v285
        %500 = vmatprep.subr.mxu0 %v284
        %501 = vmatpush1.msra.mxu0 %v283
        %502 = vmatprep.subr.mxu0 %v282
        %503 = vmatpush1.msra.mxu0 %v281
        %504 = vmatprep.subr.mxu0 %v280
        %505 = vmatpush1.msra.mxu0 %v279
        %506 = vmatprep.subr.mxu0 %v278
        %507 = vmatpush1.msra.mxu0 %v277
        %508 = vmatprep.subr.mxu0 %v340
        %509 = vmatpush2.msra.mxu0 %v339
        %510 = vmatprep.subr.mxu0 %v338
        %511 = vmatpush2.msra.mxu0 %v337
        %512 = vmatprep.subr.mxu0 %v336
        %513 = vmatpush2.msra.mxu0 %v335
        %514 = vmatprep.subr.mxu0 %v334
        %515 = vmatpush2.msra.mxu0 %v333
        %516 = vmatprep.subr.mxu0 %v332
        %517 = vmatpush2.msra.mxu0 %v331
        %518 = vmatprep.subr.mxu0 %v330
        %519 = vmatpush2.msra.mxu0 %v329
        %520 = vmatprep.subr.mxu0 %v328
        %521 = vmatpush2.msra.mxu0 %v327
        %522 = vmatprep.subr.mxu0 %v326
        %523 = vmatpush2.msra.mxu0 %v325
        %524 = vmatprep.subr.mxu0 %v324
        %525 = vmatpush2.msra.mxu0 %v323
        %526 = vmatprep.subr.mxu0 %v322
        %527 = vmatpush2.msra.mxu0 %v321
        %528 = vmatprep.subr.mxu0 %v320
        %529 = vmatpush2.msra.mxu0 %v319
        %530 = vmatprep.subr.mxu0 %v318
        %531 = vmatpush2.msra.mxu0 %v317
        %532 = vmatprep.subr.mxu0 %v316
        %533 = vmatpush2.msra.mxu0 %v315
        %534 = vmatprep.subr.mxu0 %v314
        %535 = vmatpush2.msra.mxu0 %v313
        %536 = vmatprep.subr.mxu0 %v312
        %537 = vmatpush2.msra.mxu0 %v311
        %538 = vmatprep.subr.mxu0 %v310
        %539 = vmatpush2.msra.mxu0 %v309
        %540 = vmatprep.mubr.f32.mxu0 %v262
        %541 = vmatmul.mubr.f32.gmra.mxu0 %v261
        %v542 = vpop.f32.mrf.mxu0
        %v543 = vadd.f32 %v472, %v542
        %v544 = vpop.f32.mrf.mxu0
        %v545 = vadd.f32 %v474, %v544
        %546 = vdwg.mxu0
        %s547 = sld [smem:[#allocation2]]
        %v548 = vstv %s547
        %v549 = vadd.f32 %v543, %v548
        %v550 = vadd.f32 %v545, %v548
        %v551 = vsub.f32 0.0, %v549
        %v552 = vsub.f32 0.0, %v550
        %v553 = vmul.f32 %v551, 1.442695
        %v554 = vpow.pop %v553
        %v555 = vmul.f32 %v552, 1.442695
        %v556 = vpow.pop %v555
        %v557 = vadd.f32 %v554, 1.0
        %v558 = vadd.f32 %v556, 1.0
        %v559 = vrcp.pop %v557
        %v560 = vmul.f32 1.0, %v559
        %v561 = vrcp.pop %v558
        %v562 = vmul.f32 1.0, %v561
        %v563 = vlaneseq
        %v564 = vshrl.u32 %v563, 7
        %v565 = vsub.s32 0, %v564
        %v566 = vrot.slane %v560, %v565
        %v567 = vlaneseq
        %v568 = vshrl.u32 %v567, 7
        %v569 = vsub.s32 0, %v568
        %v570 = vrot.slane %v562, %v569
        %v573 = vcombine.low %v566, %v570
        %v575 = vmul.f32 %v242, %v573
        %576 = vst [vmem:[%s241] sm:$0xff] %v575
        %s577 = sand.u32 %s118, 1
        %s578 = scalar_lea.sflag [#allocation5], %s577
        %s579 = sand.u32 %s118, 1
        %s580 = smul.addr %s579, 8
        %s581 = scalar_lea.vmem [#allocation9], %s580
        // Predicated region
        $region49: #{tpu_custom_call.1} parent=35 // pred_check
          %p582 = pneg %p128
        $region50: #{tpu_custom_call.1} parent=35 // pred_check_branch
          %584 = sbr.rel (%p582) target = $region52
        $region51: #{tpu_custom_call.1} parent=35 // pred_region
          %s586 = ssub.s32 128, 128
          %587 = vsyncadd %s578, %s586
          %s588 = smul.addr %s21, 2
          %s589 = smul.addr %s588, 64
          %s590 = scalar_lea.hbm %s4, %s589
          %s592 = sshll.u32 %s581, 4
          %s593 = int_to_ptr.vmem [resolvable:$true] %s592
          %595 = dma.vmem_to_hbm [thread:$0]  %s593, 128, %s590, %s578
        $region52: #{tpu_custom_call.1} parent=35 // pred_fallthru
          _
      $region36: #{tpu_custom_call.1} parent=5 // pred_fallthru
        _
      %p596 = scmp.le.s32.totalorder 2, %s16
      // Predicated region
      $region53: #{tpu_custom_call.1} parent=5 // pred_check
        %p597 = pneg %p596
      $region54: #{tpu_custom_call.1} parent=5 // pred_check_branch
        %599 = sbr.rel (%p597) target = $region56
      $region55: #{tpu_custom_call.1} parent=5 // pred_region
        %s600 = ssub.s32 %s16, 2
        // Predicated region
        $region57: #{tpu_custom_call.1} parent=55 // pred_check
          %p601 = pneg %p134
        $region58: #{tpu_custom_call.1} parent=55 // pred_check_branch
          %603 = sbr.rel (%p601) target = $region60
        $region59: #{tpu_custom_call.1} parent=55 // pred_region
          %s604 = sand.u32 %s119, 1
          %s605 = scalar_lea.sflag [#allocation5], %s604
          %s606 = sand.u32 %s119, 1
          %s607 = smul.addr %s606, 8
          %s608 = scalar_lea.vmem [#allocation9], %s607
          %609 = dma.done %s605, 128
        $region60: #{tpu_custom_call.1} parent=55 // pred_fallthru
          _
      $region56: #{tpu_custom_call.1} parent=5 // pred_fallthru
        _
    $region6: #{tpu_custom_call.1} parent=1 // loop_footer
      %s20 = sadd.s32 1, %s16
    $region7: #{tpu_custom_call.1} parent=1 // loop_footer_branch
      %15 = sbr.rel target = $region3
    $region8: #{tpu_custom_call.1} parent=1 // loop_exit
      _
    %610 = vsyncpa [#allocation4], 1
    %s611 = scalar_lea.sflag [#allocation4], 1
    %612 = vsyncpa %s611, 1
    %613 = vsyncpa [#allocation7], 1
    %614 = vsyncpa [#allocation5], 1
    %s615 = scalar_lea.sflag [#allocation5], 1
    %616 = vsyncpa %s615, 1

</llo_original>
